<compile_context>
chip_gen: v6e
topology: v6e:2x2x1
jax: 0.10.0
libtpu: 0.0.40
codegen_flags: <defaults>
</compile_context>

<pallas_src>
import math
import functools

import jax
import jax.numpy as jnp
from jax.experimental import pallas as pl
from jax.experimental.pallas import tpu as pltpu

EPS = 1e-6  # LayerNormalization eps (tutorial-style: unbiased std, eps added to std)


# ----------------------------------------------------------------------------
# Tiling / padding helpers
# ----------------------------------------------------------------------------
def _round_up(x, m):
    return ((x + m - 1) // m) * m


def _tile(dim, target, granule):
    """Largest tile <= target that divides `dim` and is a multiple of
    `granule`; falls back to the full dim (bounded model dims only)."""
    if dim <= target:
        return dim
    t = (target // granule) * granule
    while t >= granule:
        if dim % t == 0:
            return t
        t -= granule
    return dim


def _pad_rows(a, mult):
    m = a.shape[0]
    mp = _round_up(m, mult)
    if mp == m:
        return a
    return jnp.pad(a, ((0, mp - m), (0, 0)))


def _vmem_limit(*blocks):
    """Double-buffered VMEM estimate for the given (shape, dtype) blocks,
    clamped to [32 MiB, 64 MiB] (64 MiB = v7x physical per-TC)."""
    total = 0
    for shape, dtype in blocks:
        n = 1
        for s in shape:
            n *= int(s)
        total += 2 * n * jnp.dtype(dtype).itemsize
    total += 8 << 20  # slack for small operands / compiler scratch
    return int(min(max(total, 32 << 20), 64 << 20))


def _ln_rows(x_f32):
    """Tutorial-style LayerNorm stats: unbiased var, eps added to std.
    Divide replaced by one per-row reciprocal (EUP) + multiply."""
    d = x_f32.shape[-1]
    mean = jnp.mean(x_f32, axis=-1, keepdims=True)
    xc = x_f32 - mean
    var = jnp.sum(xc * xc, axis=-1, keepdims=True) / (d - 1)
    rstd = pl.reciprocal(jnp.sqrt(var) + EPS, approx=False)
    return xc, rstd


# ----------------------------------------------------------------------------
# Pallas kernels
# ----------------------------------------------------------------------------
def _layernorm_kernel(x_ref, a_ref, b_ref, o_ref):
    xc, rstd = _ln_rows(x_ref[...].astype(jnp.float32))
    o_ref[...] = (a_ref[...] * (xc * rstd) + b_ref[...]).astype(o_ref.dtype)


def _ln_matmul_kernel(*refs, relu, has_bias):
    """Fused pre-norm LayerNorm + matmul (+ bias / ReLU epilogue).

    Grid (i, j), j inner.  refs: x (tm, K), alpha (1, K), beta (1, K),
    w (K, tn) [bf16], [bias (1, tn)], out (tm, tn), xn scratch (tm, K) bf16.
    LN stats are computed once per row tile (j == 0) and reused across j.
    """
    x_ref, a_ref, b_ref, w_ref = refs[:4]
    idx = 4
    bias_ref = refs[idx] if has_bias else None
    idx += 1 if has_bias else 0
    o_ref = refs[idx]
    xn_ref = refs[idx + 1]

    @pl.when(pl.program_id(1) == 0)
    def _():
        xc, rstd = _ln_rows(x_ref[...].astype(jnp.float32))
        xn = a_ref[...] * (xc * rstd) + b_ref[...]
        xn_ref[...] = xn.astype(xn_ref.dtype)

    y = jnp.dot(xn_ref[...], w_ref[...], preferred_element_type=jnp.float32)
    if has_bias:
        y = y + bias_ref[...].astype(jnp.float32)
    if relu:
        y = jnp.maximum(y, 0.0)
    o_ref[...] = y.astype(o_ref.dtype)


def _matmul_kernel(*refs, relu, has_bias, has_residual, has_final_ln):
    """Tiled matmul (bf16 MXU operands, f32 accumulator) with fused
    bias / ReLU / residual / final-LayerNorm epilogue.

    Grid (i, j, k); refs: x (tm, tk), w (tk, tn) [bf16], [bias (1, tn)],
    [residual (tm, tn)], [ln_a (1, tn), ln_b (1, tn)], out (tm, tn),
    acc scratch (tm, tn) f32.
    """
    x_ref, w_ref = refs[0], refs[1]
    idx = 2
    bias_ref = refs[idx] if has_bias else None
    idx += 1 if has_bias else 0
    r_ref = refs[idx] if has_residual else None
    idx += 1 if has_residual else 0
    if has_final_ln:
        ln_a_ref, ln_b_ref = refs[idx], refs[idx + 1]
        idx += 2
    o_ref, acc_ref = refs[idx], refs[idx + 1]

    @pl.when(pl.program_id(2) == 0)
    def _():
        acc_ref[...] = jnp.zeros_like(acc_ref)

    acc_ref[...] += jnp.dot(x_ref[...].astype(w_ref.dtype), w_ref[...],
                            preferred_element_type=jnp.float32)

    @pl.when(pl.program_id(2) == pl.num_programs(2) - 1)
    def _():
        y = acc_ref[...]
        if has_bias:
            y = y + bias_ref[...].astype(jnp.float32)
        if relu:
            y = jnp.maximum(y, 0.0)
        if has_residual:
            y = y + r_ref[...].astype(jnp.float32)
        if has_final_ln:
            yc, rstd = _ln_rows(y)
            y = ln_a_ref[...] * (yc * rstd) + ln_b_ref[...]
        o_ref[...] = y.astype(o_ref.dtype)


def _attn_kernel(q_ref, k_ref, v_ref, m_ref, o_ref, *, scale):
    """One (batch, head, q-tile) grid step.
    q (1, tq, dk), k/v (1, Sk, dk), additive mask (1, 1, tq|1, Sk) f32."""
    q = q_ref[0].astype(jnp.bfloat16)
    k = k_ref[0].astype(jnp.bfloat16)
    v = v_ref[0].astype(jnp.bfloat16)
    s = jax.lax.dot_general(q, k, (((1,), (1,)), ((), ())),
                            preferred_element_type=jnp.float32)
    s = s * scale + m_ref[0, 0]          # additive mask: 0 or -1e9
    s = s - jnp.max(s, axis=-1, keepdims=True)
    p = jnp.exp(s)
    p = p * pl.reciprocal(jnp.sum(p, axis=-1, keepdims=True), approx=True)
    ctx = jnp.dot(p.astype(jnp.bfloat16), v, preferred_element_type=jnp.float32)
    o_ref[0] = ctx.astype(o_ref.dtype)


# ----------------------------------------------------------------------------
# Pallas wrappers
# ----------------------------------------------------------------------------
def layernorm(x2d, alpha, beta):
    M, D = x2d.shape
    tm = min(512, _round_up(M, 8))
    x_p = _pad_rows(x2d, tm)
    Mp = x_p.shape[0]
    out = pl.pallas_call(
        _layernorm_kernel,
        out_shape=jax.ShapeDtypeStruct((Mp, D), x2d.dtype),
        grid=(Mp // tm,),
        in_specs=[
            pl.BlockSpec((tm, D), lambda i: (i, 0)),
            pl.BlockSpec((1, D), lambda i: (0, 0)),
            pl.BlockSpec((1, D), lambda i: (0, 0)),
        ],
        out_specs=pl.BlockSpec((tm, D), lambda i: (i, 0)),
        compiler_params=pltpu.CompilerParams(
            dimension_semantics=("parallel",),
            vmem_limit_bytes=_vmem_limit(((tm, D), x2d.dtype), ((tm, D), x2d.dtype))),
    )(x_p, alpha.reshape(1, D), beta.reshape(1, D))
    return out[:M] if Mp != M else out


def ln_matmul(x2d, alpha, beta, w, bias=None, relu=False):
    """out = [relu]( LN(x) @ w [+ bias] ).  K (=d_model) is not tiled so LN
    stats are exact; normalized rows cached in a bf16 scratch across N tiles."""
    M, K = x2d.shape
    _, N = w.shape
    tm = min(256, _round_up(M, 8))
    tn = _tile(N, 512, 128)
    x_p = _pad_rows(x2d, tm)
    Mp = x_p.shape[0]

    in_specs = [
        pl.BlockSpec((tm, K), lambda i, j: (i, 0)),
        pl.BlockSpec((1, K), lambda i, j: (0, 0)),
        pl.BlockSpec((1, K), lambda i, j: (0, 0)),
        pl.BlockSpec((K, tn), lambda i, j: (0, j)),
    ]
    args = [x_p, alpha.reshape(1, K), beta.reshape(1, K), w]
    if bias is not None:
        in_specs.append(pl.BlockSpec((1, tn), lambda i, j: (0, j)))
        args.append(bias.reshape(1, N))

    out = pl.pallas_call(
        functools.partial(_ln_matmul_kernel, relu=relu, has_bias=bias is not None),
        out_shape=jax.ShapeDtypeStruct((Mp, N), x2d.dtype),
        grid=(Mp // tm, N // tn),
        in_specs=in_specs,
        out_specs=pl.BlockSpec((tm, tn), lambda i, j: (i, j)),
        scratch_shapes=[pltpu.VMEM((tm, K), jnp.bfloat16)],
        compiler_params=pltpu.CompilerParams(
            dimension_semantics=("parallel", "arbitrary"),
            vmem_limit_bytes=_vmem_limit(((tm, K), x2d.dtype), ((K, tn), w.dtype),
                                         ((tm, tn), x2d.dtype), ((tm, K), jnp.bfloat16))),
        cost_estimate=pl.CostEstimate(
            flops=2 * Mp * N * K, transcendentals=0,
            bytes_accessed=x2d.dtype.itemsize * (Mp * K + Mp * N)
                           + w.dtype.itemsize * K * N),
    )(*args)
    return out[:M] if Mp != M else out


def matmul(x2d, w, bias=None, residual=None, relu=False, final_ln=None):
    """out = [LN]([relu](x @ w [+ bias]) [+ residual]), tiled over M, N, K.
    bf16 MXU operands, f32 accumulator.  final_ln=(alpha, beta) fuses the
    decoder's final LayerNormalization into the epilogue (forces tn = N)."""
    M, K = x2d.shape
    _, N = w.shape
    tm = min(256 if final_ln is not None else 512, _round_up(M, 8))
    tn = N if final_ln is not None else _tile(N, 512, 128)
    tk = _tile(K, 512, 128)
    x_p = _pad_rows(x2d, tm)
    Mp = x_p.shape[0]

    in_specs = [
        pl.BlockSpec((tm, tk), lambda i, j, k: (i, k)),
        pl.BlockSpec((tk, tn), lambda i, j, k: (k, j)),
    ]
    args = [x_p, w]
    if bias is not None:
        in_specs.append(pl.BlockSpec((1, tn), lambda i, j, k: (0, j)))
        args.append(bias.reshape(1, N))
    if residual is not None:
        in_specs.append(pl.BlockSpec((tm, tn), lambda i, j, k: (i, j)))
        args.append(_pad_rows(residual, tm))
    if final_ln is not None:
        ln_a, ln_b = final_ln
        in_specs.append(pl.BlockSpec((1, N), lambda i, j, k: (0, 0)))
        in_specs.append(pl.BlockSpec((1, N), lambda i, j, k: (0, 0)))
        args.extend([ln_a.reshape(1, N), ln_b.reshape(1, N)])

    out = pl.pallas_call(
        functools.partial(_matmul_kernel, relu=relu,
                          has_bias=bias is not None,
                          has_residual=residual is not None,
                          has_final_ln=final_ln is not None),
        out_shape=jax.ShapeDtypeStruct((Mp, N), x2d.dtype),
        grid=(Mp // tm, N // tn, K // tk),
        in_specs=in_specs,
        out_specs=pl.BlockSpec((tm, tn), lambda i, j, k: (i, j)),
        scratch_shapes=[pltpu.VMEM((tm, tn), jnp.float32)],
        compiler_params=pltpu.CompilerParams(
            dimension_semantics=("parallel", "parallel", "arbitrary"),
            vmem_limit_bytes=_vmem_limit(((tm, tk), x2d.dtype), ((tk, tn), w.dtype),
                                         ((tm, tn), x2d.dtype), ((tm, tn), jnp.float32),
                                         ((tm, tn), x2d.dtype))),
        cost_estimate=pl.CostEstimate(
            flops=2 * Mp * N * K, transcendentals=0,
            bytes_accessed=x2d.dtype.itemsize * (Mp * K + Mp * N)
                           + w.dtype.itemsize * K * N
                           + (x2d.dtype.itemsize * Mp * N if residual is not None else 0)),
    )(*args)
    return out[:M] if Mp != M else out


def _mask_spec(mask, tq):
    """BlockSpec for the additive (B|1, 1, mq, Sk) mask, indexed directly."""
    mB, _, mq, mSk = mask.shape
    bsel = (lambda b: 0) if mB == 1 else (lambda b: b)
    if mq == 1:
        return pl.BlockSpec((1, 1, 1, mSk), lambda b, hd, qi: (bsel(b), 0, 0, 0))
    return pl.BlockSpec((1, 1, tq, mSk), lambda b, hd, qi: (bsel(b), 0, qi, 0))


def attention(q_arr, kv_arr, mask_add, *, h, dk, k_block_off, v_block_off):
    """Multi-head scaled-dot-product attention.

    q_arr:  (B, Sq, >= h*dk) — head hd's query lives at columns [hd*dk, (hd+1)*dk).
    kv_arr: (B, Sk, *)       — head hd's key / value live at block indices
                               k_block_off + hd / v_block_off + hd (dk-wide).
    mask_add: additive f32 mask (B|1, 1, Sq|1, Sk) with 0 / -1e9 entries.
    Grid = (B, heads, q_tiles), all parallel (megacore-friendly on v7x).
    """
    B, Sq, _ = q_arr.shape
    Sk = kv_arr.shape[1]
    D = h * dk
    scale = 1.0 / math.sqrt(dk)
    tq = _tile(Sq, 256, 8)
    nq = Sq // tq
    # TODO(synk): for very long Sk, also tile the KV axis (flash-style online
    # softmax) so the (tq, Sk) score block stays bounded.

    return pl.pallas_call(
        functools.partial(_attn_kernel, scale=scale),
        out_shape=jax.ShapeDtypeStruct((B, Sq, D), q_arr.dtype),
        grid=(B, h, nq),
        in_specs=[
            pl.BlockSpec((1, tq, dk), lambda b, hd, qi: (b, qi, hd)),
            pl.BlockSpec((1, Sk, dk), lambda b, hd, qi: (b, 0, k_block_off + hd)),
            pl.BlockSpec((1, Sk, dk), lambda b, hd, qi: (b, 0, v_block_off + hd)),
            _mask_spec(mask_add, tq),
        ],
        out_specs=pl.BlockSpec((1, tq, dk), lambda b, hd, qi: (b, qi, hd)),
        compiler_params=pltpu.CompilerParams(
            dimension_semantics=("parallel", "parallel", "parallel"),
            vmem_limit_bytes=_vmem_limit(((tq, dk), q_arr.dtype),
                                         ((Sk, dk), kv_arr.dtype),
                                         ((Sk, dk), kv_arr.dtype),
                                         ((tq, Sk), jnp.float32),
                                         ((tq, dk), q_arr.dtype))),
    )(q_arr, kv_arr, kv_arr, mask_add)


# ----------------------------------------------------------------------------
# Parameter preparation (done once, outside the forward pass)
# ----------------------------------------------------------------------------
def prepare_params(params):
    """bf16 weights, fused [Wq|Wk|Wv] and [Wk|Wv] concatenations."""
    cdt = jnp.bfloat16
    layers = []
    for lp in params["layers"]:
        sa, ca, ff = lp["self_attn"], lp["cross_attn"], lp["ffn"]
        layers.append({
            "ln0_a": lp["ln0_a"], "ln0_b": lp["ln0_b"],
            "ln1_a": lp["ln1_a"], "ln1_b": lp["ln1_b"],
            "ln2_a": lp["ln2_a"], "ln2_b": lp["ln2_b"],
            "self_attn": {
                "w_qkv": jnp.concatenate([sa["wq"], sa["wk"], sa["wv"]], axis=1).astype(cdt),
                "wo": sa["wo"].astype(cdt),
            },
            "cross_attn": {
                "wq": ca["wq"].astype(cdt),
                "w_kv": jnp.concatenate([ca["wk"], ca["wv"]], axis=1).astype(cdt),
                "wo": ca["wo"].astype(cdt),
            },
            "ffn": {
                "w1": ff["w1"].astype(cdt), "b1": ff["b1"],
                "w2": ff["w2"].astype(cdt), "b2": ff["b2"],
            },
        })
    return {"layers": layers, "norm_a": params["norm_a"],
            "norm_b": params["norm_b"], "h": params["h"]}


# ----------------------------------------------------------------------------
# Decoder forward (glue in plain JAX, hot paths in Pallas)
# ----------------------------------------------------------------------------
def decoder_forward(params, x, encoder_output, src_mask, tgt_mask):
    """Decoder.forward: N x DecoderBlock then final LayerNormalization.
    Dropout in the residual connections is identity (eval mode)."""
    B, Sq, D = x.shape
    Sk = encoder_output.shape[1]
    h = params["h"]
    dk = D // h
    # TODO(synk): attention kernel assumes head_dim is a multiple of 128
    # (lane-aligned per-head BlockSpec slices); add a fallback for small dk.
    assert D % h == 0 and dk % 128 == 0, "head_dim must be a multiple of 128"

    x2d = x.reshape(B * Sq, D)
    enc2d = encoder_output.reshape(B * Sk, D)

    # Additive f32 masks (0 / -1e9), built once and reused by every layer.
    tgt_add = jnp.where(tgt_mask == 0, -1e9, 0.0).astype(jnp.float32)
    src_add = jnp.where(src_mask == 0, -1e9, 0.0).astype(jnp.float32)

    n_layers = len(params["layers"])
    fused_final = False
    for li, lp in enumerate(params["layers"]):
        # --- Residual block 0: x + self_attn(LN(x), LN(x), LN(x), tgt_mask)
        sa = lp["self_attn"]
        qkv = ln_matmul(x2d, lp["ln0_a"], lp["ln0_b"], sa["w_qkv"])     # (M, 3D)
        ctx = attention(qkv.reshape(B, Sq, 3 * D), qkv.reshape(B, Sq, 3 * D),
                        tgt_add, h=h, dk=dk, k_block_off=h, v_block_off=2 * h)
        x2d = matmul(ctx.reshape(B * Sq, D), sa["wo"], residual=x2d)

        # --- Residual block 1: x + cross_attn(LN(x), enc, enc, src_mask)
        ca = lp["cross_attn"]
        q = ln_matmul(x2d, lp["ln1_a"], lp["ln1_b"], ca["wq"])          # (M, D)
        kv = matmul(enc2d, ca["w_kv"])                                  # (B*Sk, 2D)
        ctx = attention(q.reshape(B, Sq, D), kv.reshape(B, Sk, 2 * D),
                        src_add, h=h, dk=dk, k_block_off=0, v_block_off=h)
        x2d = matmul(ctx.reshape(B * Sq, D), ca["wo"], residual=x2d)

        # --- Residual block 2: x + FFN(LN(x)); final LN fused on last layer.
        ff = lp["ffn"]
        h1 = ln_matmul(x2d, lp["ln2_a"], lp["ln2_b"], ff["w1"],
                       bias=ff["b1"], relu=True)
        do_fuse = (li == n_layers - 1) and D <= 4096
        x2d = matmul(h1, ff["w2"], bias=ff["b2"], residual=x2d,
                     final_ln=((params["norm_a"], params["norm_b"])
                               if do_fuse else None))
        fused_final = fused_final or do_fuse

    if not fused_final:
        x2d = layernorm(x2d, params["norm_a"], params["norm_b"])
    return x2d.reshape(B, Sq, D)


# ----------------------------------------------------------------------------
# Pure-JAX reference (correctness sanity check, f32 weights)
# ----------------------------------------------------------------------------
def _ln_ref(x, a, b):
    mean = x.mean(-1, keepdims=True)
    xc = x - mean
    var = (xc * xc).sum(-1, keepdims=True) / (x.shape[-1] - 1)
    return a * xc / (jnp.sqrt(var) + EPS) + b


def _mha_ref(q, k, v, mask, p, h):
    B, Sq, D = q.shape
    Sk = k.shape[1]
    dk = D // h
    qp, kp, vp = q @ p["wq"], k @ p["wk"], v @ p["wv"]
    qh = qp.reshape(B, Sq, h, dk).transpose(0, 2, 1, 3)
    kh = kp.reshape(B, Sk, h, dk).transpose(0, 2, 1, 3)
    vh = vp.reshape(B, Sk, h, dk).transpose(0, 2, 1, 3)
    s = (qh @ kh.transpose(0, 1, 3, 2)) / math.sqrt(dk)
    s = jnp.where(mask == 0, -1e9, s)
    p_att = jax.nn.softmax(s, axis=-1)
    ctx = (p_att @ vh).transpose(0, 2, 1, 3).reshape(B, Sq, D)
    return ctx @ p["wo"]


def decoder_ref(params, x, enc, src_mask, tgt_mask):
    for lp in params["layers"]:
        xn = _ln_ref(x, lp["ln0_a"], lp["ln0_b"])
        x = x + _mha_ref(xn, xn, xn, tgt_mask, lp["self_attn"], params["h"])
        xn = _ln_ref(x, lp["ln1_a"], lp["ln1_b"])
        x = x + _mha_ref(xn, enc, enc, src_mask, lp["cross_attn"], params["h"])
        xn = _ln_ref(x, lp["ln2_a"], lp["ln2_b"])
        ff = jnp.maximum(xn @ lp["ffn"]["w1"] + lp["ffn"]["b1"], 0.0)
        x = x + ff @ lp["ffn"]["w2"] + lp["ffn"]["b2"]
    return _ln_ref(x, params["norm_a"], params["norm_b"])


# ----------------------------------------------------------------------------
# Deterministic parameter init (raw f32, torch-like separate projections)
# ----------------------------------------------------------------------------
def init_params(key, n_layers, d_model, d_ff, h):
    layers = []
    for _ in range(n_layers):
        key, *ks = jax.random.split(key, 13)
        sd = 1.0 / math.sqrt(d_model)
        lp = {
            "ln0_a": jnp.ones((d_model,), jnp.float32),
            "ln0_b": jnp.zeros((d_model,), jnp.float32),
            "ln1_a": jnp.ones((d_model,), jnp.float32),
            "ln1_b": jnp.zeros((d_model,), jnp.float32),
            "ln2_a": jnp.ones((d_model,), jnp.float32),
            "ln2_b": jnp.zeros((d_model,), jnp.float32),
            "self_attn": {
                "wq": jax.random.normal(ks[0], (d_model, d_model), jnp.float32) * sd,
                "wk": jax.random.normal(ks[1], (d_model, d_model), jnp.float32) * sd,
                "wv": jax.random.normal(ks[2], (d_model, d_model), jnp.float32) * sd,
                "wo": jax.random.normal(ks[3], (d_model, d_model), jnp.float32) * sd,
            },
            "cross_attn": {
                "wq": jax.random.normal(ks[4], (d_model, d_model), jnp.float32) * sd,
                "wk": jax.random.normal(ks[5], (d_model, d_model), jnp.float32) * sd,
                "wv": jax.random.normal(ks[6], (d_model, d_model), jnp.float32) * sd,
                "wo": jax.random.normal(ks[7], (d_model, d_model), jnp.float32) * sd,
            },
            "ffn": {
                "w1": jax.random.normal(ks[8], (d_model, d_ff), jnp.float32) * sd,
                "b1": jax.random.normal(ks[9], (d_ff,), jnp.float32) * 0.01,
                "w2": jax.random.normal(ks[10], (d_ff, d_model), jnp.float32)
                      * (1.0 / math.sqrt(d_ff)),
                "b2": jax.random.normal(ks[11], (d_model,), jnp.float32) * 0.01,
            },
        }
        layers.append(lp)
    return {
        "layers": layers,
        "norm_a": jnp.ones((d_model,), jnp.float32),
        "norm_b": jnp.zeros((d_model,), jnp.float32),
        "h": h,
    }


# ----------------------------------------------------------------------------
if __name__ == "__main__":
    # Small but lane-aligned config: head_dim = D / H = 128.
    B, S_TGT, S_SRC, D, H, DFF, N_LAYERS = 2, 8, 8, 256, 2, 512, 2

    key = jax.random.PRNGKey(0)
    k_x, k_enc, k_p = jax.random.split(key, 3)
    x = jax.random.normal(k_x, (B, S_TGT, D), jnp.float32)
    encoder_output = jax.random.normal(k_enc, (B, S_SRC, D), jnp.float32)

    # tgt_mask: causal (B, 1, S_tgt, S_tgt); src_mask: padding (B, 1, 1, S_src)
    causal = jnp.tril(jnp.ones((S_TGT, S_TGT), jnp.int32))
    tgt_mask = jnp.broadcast_to(causal, (B, 1, S_TGT, S_TGT))
    src_mask = jnp.ones((B, 1, 1, S_SRC), jnp.int32)
    src_mask = src_mask.at[0, 0, 0, S_SRC - 1].set(0)  # pad last src token, batch 0

    raw_params = init_params(k_p, N_LAYERS, D, DFF, H)
    params = prepare_params(raw_params)

    out = decoder_forward(params, x, encoder_output, src_mask, tgt_mask)
    out = jax.block_until_ready(out)

    ref = decoder_ref(raw_params, x, encoder_output, src_mask, tgt_mask)
    assert out.shape == (B, S_TGT, D)
    assert jnp.allclose(out, ref, atol=5e-2, rtol=5e-2), "mismatch vs reference"

    print("KERNEL_OK")
</pallas_src>

<mosaic_0001>
module attributes {stable_mosaic.version = 11 : i64} {
  func.func @_ln_matmul_kernel(%arg0: i32, %arg1: i32, %arg2: memref<16x256xf32, #tpu.memory_space<vmem>>, %arg3: memref<1x256xf32, #tpu.memory_space<vmem>>, %arg4: memref<1x256xf32, #tpu.memory_space<vmem>>, %arg5: memref<256x384xbf16, #tpu.memory_space<vmem>>, %arg6: memref<16x384xf32, #tpu.memory_space<vmem>>, %arg7: memref<16x256xbf16, #tpu.memory_space<vmem>>) attributes {dimension_semantics = [#tpu.dimension_semantics<parallel>, #tpu.dimension_semantics<arbitrary>], iteration_bounds = array<i64: 1, 2>, scalar_prefetch = 0 : i64, scratch_operands = 1 : i64, tpu.core_type = #tpu.core_type<tc>, window_params = [{transform_indices = @transform_0, window_bounds = array<i64: 16, 256>}, {pipeline_mode = #tpu.pipeline_mode<synchronous>, transform_indices = @transform_1, window_bounds = array<i64: 1, 256>}, {pipeline_mode = #tpu.pipeline_mode<synchronous>, transform_indices = @transform_2, window_bounds = array<i64: 1, 256>}, {transform_indices = @transform_3, window_bounds = array<i64: 256, 384>}, {transform_indices = @transform_4, window_bounds = array<i64: 16, 384>}]} {
    %c0_i32 = arith.constant 0 : i32
    %0 = arith.cmpi eq, %arg1, %c0_i32 : i32
    %1 = arith.extui %0 : i1 to i32
    %c0_i32_0 = arith.constant 0 : i32
    %2 = arith.cmpi ne, %1, %c0_i32_0 : i32
    scf.if %2 {
      %c0_6 = arith.constant 0 : index
      %c0_7 = arith.constant 0 : index
      %7 = vector.load %arg2[%c0_6, %c0_7] : memref<16x256xf32, #tpu.memory_space<vmem>>, vector<16x256xf32>
      %cst_8 = arith.constant dense<0.000000e+00> : vector<16xf32>
      %8 = vector.multi_reduction <add>, %7, %cst_8 [1] : vector<16x256xf32> to vector<16xf32>
      %9 = vector.shape_cast %8 : vector<16xf32> to vector<16x1xf32>
      %cst_9 = arith.constant 2.560000e+02 : f32
      %10 = vector.broadcast %cst_9 : f32 to vector<16x1xf32>
      %11 = arith.divf %9, %10 : vector<16x1xf32>
      %12 = vector.broadcast %11 : vector<16x1xf32> to vector<16x256xf32>
      %13 = arith.subf %7, %12 : vector<16x256xf32>
      %14 = arith.mulf %13, %13 : vector<16x256xf32>
      %cst_10 = arith.constant dense<0.000000e+00> : vector<16xf32>
      %15 = vector.multi_reduction <add>, %14, %cst_10 [1] : vector<16x256xf32> to vector<16xf32>
      %16 = vector.shape_cast %15 : vector<16xf32> to vector<16x1xf32>
      %cst_11 = arith.constant 2.550000e+02 : f32
      %17 = vector.broadcast %cst_11 : f32 to vector<16x1xf32>
      %18 = arith.divf %16, %17 : vector<16x1xf32>
      %19 = math.sqrt %18 : vector<16x1xf32>
      %cst_12 = arith.constant 9.99999997E-7 : f32
      %20 = vector.broadcast %cst_12 : f32 to vector<16x1xf32>
      %21 = arith.addf %19, %20 : vector<16x1xf32>
      %22 = tpu.reciprocal %21 : vector<16x1xf32> -> vector<16x1xf32>
      %c0_13 = arith.constant 0 : index
      %c0_14 = arith.constant 0 : index
      %23 = vector.load %arg3[%c0_13, %c0_14] : memref<1x256xf32, #tpu.memory_space<vmem>>, vector<1x256xf32>
      %24 = vector.broadcast %22 : vector<16x1xf32> to vector<16x256xf32>
      %25 = arith.mulf %13, %24 : vector<16x256xf32>
      %26 = vector.broadcast %23 : vector<1x256xf32> to vector<16x256xf32>
      %27 = arith.mulf %26, %25 : vector<16x256xf32>
      %c0_15 = arith.constant 0 : index
      %c0_16 = arith.constant 0 : index
      %28 = vector.load %arg4[%c0_15, %c0_16] : memref<1x256xf32, #tpu.memory_space<vmem>>, vector<1x256xf32>
      %29 = vector.broadcast %28 : vector<1x256xf32> to vector<16x256xf32>
      %30 = arith.addf %27, %29 : vector<16x256xf32>
      %31 = arith.truncf %30 : vector<16x256xf32> to vector<16x256xbf16>
      %c0_17 = arith.constant 0 : index
      %c0_18 = arith.constant 0 : index
      %32 = vector.load %arg7[%c0_17, %c0_18] : memref<16x256xbf16, #tpu.memory_space<vmem>>, vector<16x256xbf16>
      tpu.vector_store %arg7[%c0_17, %c0_18], %31 {strides = array<i32>} : memref<16x256xbf16, #tpu.memory_space<vmem>>, vector<16x256xbf16>,
    } else {
    }
    %c0 = arith.constant 0 : index
    %c0_1 = arith.constant 0 : index
    %3 = vector.load %arg7[%c0, %c0_1] : memref<16x256xbf16, #tpu.memory_space<vmem>>, vector<16x256xbf16>
    %c0_2 = arith.constant 0 : index
    %c0_3 = arith.constant 0 : index
    %4 = vector.load %arg5[%c0_2, %c0_3] : memref<256x384xbf16, #tpu.memory_space<vmem>>, vector<256x384xbf16>
    %cst = arith.constant dense<0.000000e+00> : vector<16x384xf32>
    %5 = tpu.matmul %3, %4, %cst {dimension_numbers = #tpu.dot_dimension_numbers<[1], [0], [0], [1], [0, 0, 1, 1], [], []>} : vector<16x256xbf16>, vector<256x384xbf16>, vector<16x384xf32> -> vector<16x384xf32>
    %c0_4 = arith.constant 0 : index
    %c0_5 = arith.constant 0 : index
    %6 = vector.load %arg6[%c0_4, %c0_5] : memref<16x384xf32, #tpu.memory_space<vmem>>, vector<16x384xf32>
    tpu.vector_store %arg6[%c0_4, %c0_5], %5 {strides = array<i32>} : memref<16x384xf32, #tpu.memory_space<vmem>>, vector<16x384xf32>,
    return
  }
  func.func @transform_0(%arg0: i32, %arg1: i32) -> (i32, i32) {
    %c0_i32 = arith.constant 0 : i32
    %c0_i32_0 = arith.constant 0 : i32
    return %arg0, %c0_i32 : i32, i32
  }
  func.func @transform_1(%arg0: i32, %arg1: i32) -> (i32, i32) {
    %c0_i32 = arith.constant 0 : i32
    %c0_i32_0 = arith.constant 0 : i32
    %c0_i32_1 = arith.constant 0 : i32
    return %c0_i32, %c0_i32_0 : i32, i32
  }
  func.func @transform_2(%arg0: i32, %arg1: i32) -> (i32, i32) {
    %c0_i32 = arith.constant 0 : i32
    %c0_i32_0 = arith.constant 0 : i32
    %c0_i32_1 = arith.constant 0 : i32
    return %c0_i32, %c0_i32_0 : i32, i32
  }
  func.func @transform_3(%arg0: i32, %arg1: i32) -> (i32, i32) {
    %c0_i32 = arith.constant 0 : i32
    %c0_i32_0 = arith.constant 0 : i32
    return %c0_i32, %arg1 : i32, i32
  }
  func.func @transform_4(%arg0: i32, %arg1: i32) -> (i32, i32) {
    %c0_i32 = arith.constant 0 : i32
    return %arg0, %arg1 : i32, i32
  }
}

</mosaic_0001>

<llo_original>
// kernel: tpu_custom_call.1
$region0: #{tpu_custom_call.1}
  #allocation0 [shape = 'u32[]', space=smem, size = 0x4, offset = 0x4, fixed_abs, tag = 'smem constant byte address 0x4 - core index']
  #allocation1 [shape = 'u32[144,128]{1,0:T(1,128)}', space=vmem, size = 0x12000, scoped, tag = 'internal scratch']
  #allocation2 [shape = 'bf16[16,256]{1,0:T(8,128)(2,1)}', space=vmem, size = 0x2000, scoped, tag = 'scratch operand']
  %s0 = inlined_call_operand.hbm [shape: f32[16,256], index: 0, kind: input, shape index: {}]
  %s1 = inlined_call_operand.hbm [shape: f32[1,256], index: 1, kind: input, shape index: {}]
  %s2 = inlined_call_operand.vmem [shape: f32[1,256], index: 2, kind: input, shape index: {}]
  %s3 = inlined_call_operand.hbm [shape: bf16[256,768], index: 3, kind: input, shape index: {}]
  %s4 = inlined_call_operand.hbm [shape: f32[16,768], index: 4, kind: output, shape index: {}]
  %s5 = sld [smem:[#allocation0]]
  $region65: #{tpu_custom_call.1} parent=0
    _
  %s7 = ssub.s32 1, %s5
  %s8 = scalar_select 0, %s7, %s5
  $region1: #{tpu_custom_call.1} parent=0
    #allocation3 [shape = 'u8[16384]{0}', space=vmem, size = 0x4000, scoped, tag = 'input window, operand 0, single buffered']
    #allocation4 [shape = 's32[2]{0}', space=sflag, size = 0x8, scoped, tag = 'scoped memory for tpu_custom_call.1']
    #allocation5 [shape = 's32[2]{0}', space=sflag, size = 0x8, scoped, tag = 'scoped memory for tpu_custom_call.1']
    #allocation6 [shape = 'u8[1024]{0}', space=vmem, size = 0x400, scoped, tag = 'input window, operand 1, single buffered']
    #allocation7 [shape = 's32[1]{0}', space=sflag, size = 0x4, scoped, tag = 'scoped memory for tpu_custom_call.1']
    #allocation8 [shape = 'u8[393216]{0}', space=vmem, size = 0x60000, scoped, tag = 'input window, operand 3']
    #allocation9 [shape = 'u8[49152]{0}', space=vmem, size = 0xc000, scoped, tag = 'output window, operand 0']
    %9 = vsyncpa [#allocation4], 0
    %10 = vsyncpa [#allocation7], 0
    %11 = vsyncpa [#allocation5], 0
    %s12 = scalar_lea.sflag [#allocation5], 1
    %13 = vsyncpa %s12, 0
    loop: start=0, step=1, limit=4
    $region2: #{tpu_custom_call.1} parent=1 // loop_pre_header
      _
    $region3: #{tpu_custom_call.1} parent=1 // loop_header
      %s15 = sphi 0, %s19
      %p16 = scmp.ge.s32.totalorder %s15, 4
      %s22 = sphi 0, %s34
      %s23 = sphi 0, %s30
      %s24 = sphi 0, %s22
      %s25 = sphi 0, %s23
      %s26 = sphi 0, %s24
      %s27 = sphi 0, %s25
      %s37 = sphi 0, %s39
      %s40 = sphi 0, %s37
      %s41 = sphi 0, %s40
      %s57 = sphi 0, %s41
      %s61 = sphi 0, %s61
      %s63 = sphi 0, %s61
      %s64 = sphi 0, %s63
      %s78 = sphi 0, %s64
      %s82 = sphi 0, %s82
      %s84 = sphi 0, %s82
      %s85 = sphi 0, %s84
      %s99 = sphi 0, %s85
      %s105 = sphi 0, %s107
      %s108 = sphi 0, %s105
      %s109 = sphi 0, %s108
      %s125 = sphi 0, %s109
      %s133 = sphi 0, %s135
      %s136 = sphi 0, %s133
      %s137 = sphi 0, %s136
      %s153 = sphi 0, %s137
    $region4: #{tpu_custom_call.1} parent=1 // loop_header_branch
      %18 = sbr.rel (%p16) target = $region8
    $region5: #{tpu_custom_call.1} parent=1 // loop_body
      %s20 = ssub.s32 %s15, 1
      %s21 = ssub.s32 %s15, 2
      %s28 = sadd.s32 1, %s23
      %p29 = scmp.ge.s32.totalorder %s28, 2
      %s30 = scalar_select %p29, 0, %s28
      %s31 = sadd.s32 1, %s22
      %s32 = scalar_select %p29, %s31, %s22
      %p33 = scmp.ge.s32.totalorder %s32, 1
      %s34 = scalar_select %p33, 0, %s32
      %s35 = ssub.s32 %s22, %s34
      %p36 = scmp.eq.s32.totalorder %s35, 0
      %s38 = sadd.s32 %s37, 1
      %s39 = scalar_select %p36, %s37, %s38
      %p42 = pneg %p36
      %p43 = scmp.eq.s32.totalorder %s15, 1
      %p44 = por %p42, %p43
      %p45 = scmp.ne.s32.totalorder %s37, %s40
      %p46 = scmp.eq.s32.totalorder %s15, 0
      %p47 = por %p45, %p46
      %p48 = scmp.ne.s32.totalorder %s37, %s40
      %p49 = scmp.eq.s32.totalorder %s20, 1
      %p50 = por %p48, %p49
      %p51 = scmp.ne.s32.totalorder %s40, %s41
      %p52 = scmp.eq.s32.totalorder %s20, 0
      %p53 = por %p51, %p52
      %p54 = scmp.ne.s32.totalorder %s40, %s41
      %p55 = scmp.eq.s32.totalorder %s21, 1
      %p56 = por %p54, %p55
      %p58 = scmp.ne.s32.totalorder %s41, %s57
      %p59 = scmp.eq.s32.totalorder %s21, 0
      %p60 = por %p58, %p59
      %s62 = sadd.s32 %s61, 1
      %p65 = scmp.eq.s32.totalorder %s15, 1
      %p66 = scmp.ne.s32.totalorder %s61, %s63
      %p67 = scmp.eq.s32.totalorder %s15, 0
      %p68 = por %p66, %p67
      %p69 = scmp.ne.s32.totalorder %s61, %s63
      %p70 = scmp.eq.s32.totalorder %s20, 1
      %p71 = por %p69, %p70
      %p72 = scmp.ne.s32.totalorder %s63, %s64
      %p73 = scmp.eq.s32.totalorder %s20, 0
      %p74 = por %p72, %p73
      %p75 = scmp.ne.s32.totalorder %s63, %s64
      %p76 = scmp.eq.s32.totalorder %s21, 1
      %p77 = por %p75, %p76
      %p79 = scmp.ne.s32.totalorder %s64, %s78
      %p80 = scmp.eq.s32.totalorder %s21, 0
      %p81 = por %p79, %p80
      %s83 = sadd.s32 %s82, 1
      %p86 = scmp.eq.s32.totalorder %s15, 1
      %p87 = scmp.ne.s32.totalorder %s82, %s84
      %p88 = scmp.eq.s32.totalorder %s15, 0
      %p89 = por %p87, %p88
      %p90 = scmp.ne.s32.totalorder %s82, %s84
      %p91 = scmp.eq.s32.totalorder %s20, 1
      %p92 = por %p90, %p91
      %p93 = scmp.ne.s32.totalorder %s84, %s85
      %p94 = scmp.eq.s32.totalorder %s20, 0
      %p95 = por %p93, %p94
      %p96 = scmp.ne.s32.totalorder %s84, %s85
      %p97 = scmp.eq.s32.totalorder %s21, 1
      %p98 = por %p96, %p97
      %p100 = scmp.ne.s32.totalorder %s85, %s99
      %p101 = scmp.eq.s32.totalorder %s21, 0
      %p102 = por %p100, %p101
      %s103 = ssub.s32 %s23, %s30
      %p104 = scmp.eq.s32.totalorder %s103, 0
      %s106 = sadd.s32 %s105, 1
      %s107 = scalar_select %p104, %s105, %s106
      %p110 = pneg %p104
      %p111 = scmp.eq.s32.totalorder %s15, 1
      %p112 = por %p110, %p111
      %p113 = scmp.ne.s32.totalorder %s105, %s108
      %p114 = scmp.eq.s32.totalorder %s15, 0
      %p115 = por %p113, %p114
      %p116 = scmp.ne.s32.totalorder %s105, %s108
      %p117 = scmp.eq.s32.totalorder %s20, 1
      %p118 = por %p116, %p117
      %p119 = scmp.ne.s32.totalorder %s108, %s109
      %p120 = scmp.eq.s32.totalorder %s20, 0
      %p121 = por %p119, %p120
      %p122 = scmp.ne.s32.totalorder %s108, %s109
      %p123 = scmp.eq.s32.totalorder %s21, 1
      %p124 = por %p122, %p123
      %p126 = scmp.ne.s32.totalorder %s109, %s125
      %p127 = scmp.eq.s32.totalorder %s21, 0
      %p128 = por %p126, %p127
      %s129 = ssub.s32 %s22, %s34
      %s130 = ssub.s32 %s23, %s30
      %s131 = sor.u32 %s129, %s130
      %p132 = scmp.eq.s32.totalorder %s131, 0
      %s134 = sadd.s32 %s133, 1
      %s135 = scalar_select %p132, %s133, %s134
      %p138 = pneg %p132
      %p139 = scmp.eq.s32.totalorder %s15, 1
      %p140 = por %p138, %p139
      %p141 = scmp.ne.s32.totalorder %s133, %s136
      %p142 = scmp.eq.s32.totalorder %s15, 0
      %p143 = por %p141, %p142
      %p144 = scmp.ne.s32.totalorder %s133, %s136
      %p145 = scmp.eq.s32.totalorder %s20, 1
      %p146 = por %p144, %p145
      %p147 = scmp.ne.s32.totalorder %s136, %s137
      %p148 = scmp.eq.s32.totalorder %s20, 0
      %p149 = por %p147, %p148
      %p150 = scmp.ne.s32.totalorder %s136, %s137
      %p151 = scmp.eq.s32.totalorder %s21, 1
      %p152 = por %p150, %p151
      %p154 = scmp.ne.s32.totalorder %s137, %s153
      %p155 = scmp.eq.s32.totalorder %s21, 0
      %p156 = por %p154, %p155
      %p157 = scmp.le.s32.totalorder 1, %s15
      %p158 = scmp.lt.s32.totalorder %s15, 3
      %p159 = pnand %p157, %p158
      %p160 = pneg %p159
      // Predicated region
      $region9: #{tpu_custom_call.1} parent=5 // pred_check
        _
      $region10: #{tpu_custom_call.1} parent=5 // pred_check_branch
        %162 = sbr.rel (%p159) target = $region12
      $region11: #{tpu_custom_call.1} parent=5 // pred_region
        %s163 = ssub.s32 %s15, 1
        // Predicated region
        $region13: #{tpu_custom_call.1} parent=11 // pred_check
          %p164 = pneg %p53
        $region14: #{tpu_custom_call.1} parent=11 // pred_check_branch
          %166 = sbr.rel (%p164) target = $region16
        $region15: #{tpu_custom_call.1} parent=11 // pred_region
          %s167 = smul.u32 2, %s24
          %s169 = ssub.s32 512, 512
          %170 = vsyncadd [#allocation4], %s169
          %s171 = smul.addr %s167, 2
          %s172 = smul.addr %s171, 128
          %s173 = scalar_lea.hbm %s0, %s172
          %s174 = sshll.u32 [#allocation3], 4
          %s175 = int_to_ptr.vmem [resolvable:$true] %s174
          %180 = dma.hbm_to_vmem [thread:$0]  %s173, 512, %s175, [#allocation4], 256, 256, 16
        $region16: #{tpu_custom_call.1} parent=11 // pred_fallthru
          _
        // Predicated region
        $region17: #{tpu_custom_call.1} parent=11 // pred_check
          %p181 = pneg %p74
        $region18: #{tpu_custom_call.1} parent=11 // pred_check_branch
          %183 = sbr.rel (%p181) target = $region20
        $region19: #{tpu_custom_call.1} parent=11 // pred_region
          %s185 = ssub.s32 32, 32
          %186 = vsyncadd [#allocation7], %s185
          %s188 = sshll.u32 [#allocation6], 4
          %s189 = int_to_ptr.vmem [resolvable:$true] %s188
          %191 = dma.hbm_to_vmem [thread:$0]  %s1, 32, %s189, [#allocation7]
        $region20: #{tpu_custom_call.1} parent=11 // pred_fallthru
          _
        // Predicated region
        $region21: #{tpu_custom_call.1} parent=11 // pred_check
          %p192 = pneg %p95
        $region22: #{tpu_custom_call.1} parent=11 // pred_check_branch
          %194 = sbr.rel (%p192) target = $region24
        $region23: #{tpu_custom_call.1} parent=11 // pred_region
          _
        $region24: #{tpu_custom_call.1} parent=11 // pred_fallthru
          _
      $region12: #{tpu_custom_call.1} parent=5 // pred_fallthru
        _
      %p195 = scmp.lt.s32.totalorder %s15, 2
      // Predicated region
      $region25: #{tpu_custom_call.1} parent=5 // pred_check
        %p196 = pneg %p195
      $region26: #{tpu_custom_call.1} parent=5 // pred_check_branch
        %198 = sbr.rel (%p196) target = $region28
      $region27: #{tpu_custom_call.1} parent=5 // pred_region
        // Predicated region
        $region29: #{tpu_custom_call.1} parent=27 // pred_check
          %p199 = pneg %p115
        $region30: #{tpu_custom_call.1} parent=27 // pred_check_branch
          %201 = sbr.rel (%p199) target = $region32
        $region31: #{tpu_custom_call.1} parent=27 // pred_region
          %s202 = sand.u32 %s15, 1
          %s203 = scalar_lea.sflag [#allocation4], %s202
          %s204 = sand.u32 %s105, 1
          %s205 = smul.addr %s204, 384
          %s206 = scalar_lea.vmem [#allocation8], %s205
          %s207 = smul.u32 3, %s23
          %s209 = ssub.s32 6144, 6144
          %210 = vsyncadd %s203, %s209
          %s211 = smul.addr %s207, 64
          %s212 = scalar_lea.hbm %s3, %s211
          %s213 = sshll.u32 %s206, 4
          %s214 = int_to_ptr.vmem [resolvable:$true] %s213
          %219 = dma.hbm_to_vmem [thread:$0]  %s212, 6144, %s214, %s203, 384, 192, 12
        $region32: #{tpu_custom_call.1} parent=27 // pred_fallthru
          _
      $region28: #{tpu_custom_call.1} parent=5 // pred_fallthru
        _
      %p220 = scmp.le.s32.totalorder 1, %s15
      %p221 = scmp.lt.s32.totalorder %s15, 3
      %p222 = pnand %p220, %p221
      %p223 = pneg %p222
      // Predicated region
      $region33: #{tpu_custom_call.1} parent=5 // pred_check
        _
      $region34: #{tpu_custom_call.1} parent=5 // pred_check_branch
        %225 = sbr.rel (%p222) target = $region36
      $region35: #{tpu_custom_call.1} parent=5 // pred_region
        %s226 = ssub.s32 %s15, 1
        // Predicated region
        $region37: #{tpu_custom_call.1} parent=35 // pred_check
          %p227 = pneg %p53
        $region38: #{tpu_custom_call.1} parent=35 // pred_check_branch
          %229 = sbr.rel (%p227) target = $region40
        $region39: #{tpu_custom_call.1} parent=35 // pred_region
          %230 = dma.done [#allocation4], 512
        $region40: #{tpu_custom_call.1} parent=35 // pred_fallthru
          _
        // Predicated region
        $region41: #{tpu_custom_call.1} parent=35 // pred_check
          %p231 = pneg %p74
        $region42: #{tpu_custom_call.1} parent=35 // pred_check_branch
          %233 = sbr.rel (%p231) target = $region44
        $region43: #{tpu_custom_call.1} parent=35 // pred_region
          %234 = dma.done [#allocation7], 32
        $region44: #{tpu_custom_call.1} parent=35 // pred_fallthru
          _
        %s235 = sand.u32 %s20, 1
        %s236 = scalar_lea.sflag [#allocation4], %s235
        %s237 = sand.u32 %s108, 1
        %s238 = smul.addr %s237, 384
        %s239 = scalar_lea.vmem [#allocation8], %s238
        // Predicated region
        $region45: #{tpu_custom_call.1} parent=35 // pred_check
          %p240 = pneg %p121
        $region46: #{tpu_custom_call.1} parent=35 // pred_check_branch
          %242 = sbr.rel (%p240) target = $region48
        $region47: #{tpu_custom_call.1} parent=35 // pred_region
          %243 = dma.done %s236, 6144
        $region48: #{tpu_custom_call.1} parent=35 // pred_fallthru
          _
        %p244 = pneg %p53
        %p245 = pneg %p50
        %p246 = pneg %p74
        %p247 = pneg %p71
        %p248 = pneg %p95
        %p249 = pneg %p92
        %s250 = sand.u32 %s20, 1
        %s251 = scalar_lea.sflag [#allocation4], %s250
        %s252 = sand.u32 %s108, 1
        %s253 = smul.addr %s252, 384
        %s254 = scalar_lea.vmem [#allocation8], %s253
        %p255 = pneg %p121
        %p256 = pneg %p118
        %p257 = pneg %p149
        %p258 = pneg %p146
        %s259 = sand.u32 %s136, 1
        %s260 = scalar_lea.sflag [#allocation5], %s259
        %s261 = sand.u32 %s136, 1
        %s262 = smul.addr %s261, 48
        %s263 = scalar_lea.vmem [#allocation9], %s262
        %s264 = smul.u32 2, %s24
        %s265 = smul.u32 3, %s25
        %s266 = smul.u32 2, %s24
        %s267 = smul.u32 3, %s25
        %p269 = scmp.eq.s32.totalorder %s25, 0
        // Predicated region
        $region49: #{tpu_custom_call.1} parent=35 // pred_check
          %p270 = pneg %p269
        $region50: #{tpu_custom_call.1} parent=35 // pred_check_branch
          %272 = sbr.rel (%p270) target = $region52
        $region51: #{tpu_custom_call.1} parent=35 // pred_region
          %v273 = vld [vmem:[#allocation3] sm:$0xff]
          %v274 = vld [vmem:[#allocation3 + $0x8] sm:$0xff]
          %v275 = vld [vmem:[#allocation3 + $0x10] sm:$0xff]
          %v276 = vld [vmem:[#allocation3 + $0x18] sm:$0xff]
          %v277 = vadd.f32 %v273, %v274
          %278 = vadd.xlane.f32.xlu0 %v277
          %v279 = vpop.xlane.xlu0 %278
          %v280 = vadd.f32 %v275, %v276
          %281 = vadd.xlane.f32.xlu0 %v280
          %v282 = vpop.xlane.xlu0 %281
          %v283 = vrcp.pop 256.0
          %v284 = vmul.f32 %v279, %v283
          %v285 = vmul.f32 %v282, %v283
          %v286 = vsub.f32 %v273, %v284
          %v287 = vsub.f32 %v274, %v284
          %v288 = vsub.f32 %v275, %v285
          %v289 = vsub.f32 %v276, %v285
          %v290 = vmul.f32 %v286, %v286
          %v291 = vmul.f32 %v287, %v287
          %v292 = vmul.f32 %v288, %v288
          %v293 = vmul.f32 %v289, %v289
          %v294 = vadd.f32 %v290, %v291
          %295 = vadd.xlane.f32.xlu0 %v294
          %v296 = vpop.xlane.xlu0 %295
          %v297 = vadd.f32 %v292, %v293
          %298 = vadd.xlane.f32.xlu0 %v297
          %v299 = vpop.xlane.xlu0 %298
          %v300 = vrcp.pop 255.0
          %v301 = vmul.f32 %v296, %v300
          %v302 = vmul.f32 %v299, %v300
          %v303 = vrsqrt.pop %v301
          %v304 = vmul.f32 %v301, %v303
          %vm305 = vcmp.eq.f32.partialorder %v301, inf
          %v306 = vsel %vm305, %v301, %v304
          %vm307 = vcmp.eq.f32.partialorder %v301, 0.0
          %v308 = vand.u32 %v301, 2147483648
          %v309 = vsel %vm307, %v308, %v306
          %v310 = vrsqrt.pop %v302
          %v311 = vmul.f32 %v302, %v310
          %vm312 = vcmp.eq.f32.partialorder %v302, inf
          %v313 = vsel %vm312, %v302, %v311
          %vm314 = vcmp.eq.f32.partialorder %v302, 0.0
          %v315 = vand.u32 %v302, 2147483648
          %v316 = vsel %vm314, %v315, %v313
          %v317 = vadd.f32 %v309, 1e-06
          %v318 = vadd.f32 %v316, 1e-06
          %v319 = vrcp.pop %v317
          %v320 = vrcp.pop %v318
          %v321 = vld [vmem:[#allocation6] sm:$0x3]
          %v322 = vmul.f32 %v286, %v319
          %v323 = vmul.f32 %v287, %v319
          %v324 = vmul.f32 %v288, %v320
          %v325 = vmul.f32 %v289, %v320
          %v327 = vlaneseq
          %v328 = vshrl.u32 %v327, 7
          %v329 = vsub.s32 0, %v328
          %v330 = vrot.slane %v321, %v329
          %v331 = vlaneseq
          %v332 = vshrl.u32 %v331, 7
          %v333 = vsub.s32 1, %v332
          %v334 = vrot.slane %v321, %v333
          %v337 = vmul.f32 %v330, %v322
          %v338 = vmul.f32 %v334, %v323
          %v339 = vmul.f32 %v330, %v324
          %v340 = vmul.f32 %v334, %v325
          %v341 = vld [vmem:[%s2] sm:$0x3]
          %v343 = vlaneseq
          %v344 = vshrl.u32 %v343, 7
          %v345 = vsub.s32 0, %v344
          %v346 = vrot.slane %v341, %v345
          %v347 = vlaneseq
          %v348 = vshrl.u32 %v347, 7
          %v349 = vsub.s32 1, %v348
          %v350 = vrot.slane %v341, %v349
          %v353 = vadd.f32 %v337, %v346
          %v354 = vadd.f32 %v338, %v350
          %v355 = vadd.f32 %v339, %v346
          %v356 = vadd.f32 %v340, %v350
          %v357 = vpack.c.bf16 %v355, %v353
          %v358 = vpack.c.bf16 %v356, %v354
          %v361 = vunpack.c.l.b16 %v357
          %v362 = vunpack.c.l.b16 %v358
          %v363 = vunpack.c.h.b16 %v357
          %v364 = vunpack.c.h.b16 %v358
          %v365 = vpack.c.b16 %v362, %v361
          %v366 = vpack.c.b16 %v364, %v363
          %369 = vst [vmem:[#allocation2] sm:$0xff] %v365
          %370 = vst [vmem:[#allocation2 + $0x8] sm:$0xff] %v366
        $region52: #{tpu_custom_call.1} parent=35 // pred_fallthru
          _
        %v371 = vld [vmem:[#allocation2] sm:$0xff]
        %v372 = vld [vmem:[#allocation2 + $0x8] sm:$0xff]
        %v373 = vld [vmem:[%s239] sm:$0xff]
        %v374 = vld [vmem:[%s239 + $0x8] sm:$0xf]
        %v375 = vld [vmem:[%s239 + $0xc] sm:$0xff]
        %v376 = vld [vmem:[%s239 + $0x14] sm:$0xf]
        %v377 = vld [vmem:[%s239 + $0x18] sm:$0xff]
        %v378 = vld [vmem:[%s239 + $0x20] sm:$0xf]
        %v379 = vld [vmem:[%s239 + $0x24] sm:$0xff]
        %v380 = vld [vmem:[%s239 + $0x2c] sm:$0xf]
        %v381 = vld [vmem:[%s239 + $0x30] sm:$0xff]
        %v382 = vld [vmem:[%s239 + $0x38] sm:$0xf]
        %v383 = vld [vmem:[%s239 + $0x3c] sm:$0xff]
        %v384 = vld [vmem:[%s239 + $0x44] sm:$0xf]
        %v385 = vld [vmem:[%s239 + $0x48] sm:$0xff]
        %v386 = vld [vmem:[%s239 + $0x50] sm:$0xf]
        %v387 = vld [vmem:[%s239 + $0x54] sm:$0xff]
        %v388 = vld [vmem:[%s239 + $0x5c] sm:$0xf]
        %v389 = vld [vmem:[%s239 + $0x60] sm:$0xff]
        %v390 = vld [vmem:[%s239 + $0x68] sm:$0xf]
        %v391 = vld [vmem:[%s239 + $0x6c] sm:$0xff]
        %v392 = vld [vmem:[%s239 + $0x74] sm:$0xf]
        %v393 = vld [vmem:[%s239 + $0x78] sm:$0xff]
        %v394 = vld [vmem:[%s239 + $0x80] sm:$0xf]
        %v395 = vld [vmem:[%s239 + $0x84] sm:$0xff]
        %v396 = vld [vmem:[%s239 + $0x8c] sm:$0xf]
        %v397 = vld [vmem:[%s239 + $0x90] sm:$0xff]
        %v398 = vld [vmem:[%s239 + $0x98] sm:$0xf]
        %v399 = vld [vmem:[%s239 + $0x9c] sm:$0xff]
        %v400 = vld [vmem:[%s239 + $0xa4] sm:$0xf]
        %v401 = vld [vmem:[%s239 + $0xa8] sm:$0xff]
        %v402 = vld [vmem:[%s239 + $0xb0] sm:$0xf]
        %v403 = vld [vmem:[%s239 + $0xb4] sm:$0xff]
        %v404 = vld [vmem:[%s239 + $0xbc] sm:$0xf]
        %v405 = vld [vmem:[%s239 + $0xc0] sm:$0xff]
        %v406 = vld [vmem:[%s239 + $0xc8] sm:$0xf]
        %v407 = vld [vmem:[%s239 + $0xcc] sm:$0xff]
        %v408 = vld [vmem:[%s239 + $0xd4] sm:$0xf]
        %v409 = vld [vmem:[%s239 + $0xd8] sm:$0xff]
        %v410 = vld [vmem:[%s239 + $0xe0] sm:$0xf]
        %v411 = vld [vmem:[%s239 + $0xe4] sm:$0xff]
        %v412 = vld [vmem:[%s239 + $0xec] sm:$0xf]
        %v413 = vld [vmem:[%s239 + $0xf0] sm:$0xff]
        %v414 = vld [vmem:[%s239 + $0xf8] sm:$0xf]
        %v415 = vld [vmem:[%s239 + $0xfc] sm:$0xff]
        %v416 = vld [vmem:[%s239 + $0x104] sm:$0xf]
        %v417 = vld [vmem:[%s239 + $0x108] sm:$0xff]
        %v418 = vld [vmem:[%s239 + $0x110] sm:$0xf]
        %v419 = vld [vmem:[%s239 + $0x114] sm:$0xff]
        %v420 = vld [vmem:[%s239 + $0x11c] sm:$0xf]
        %v421 = vld [vmem:[%s239 + $0x120] sm:$0xff]
        %v422 = vld [vmem:[%s239 + $0x128] sm:$0xf]
        %v423 = vld [vmem:[%s239 + $0x12c] sm:$0xff]
        %v424 = vld [vmem:[%s239 + $0x134] sm:$0xf]
        %v425 = vld [vmem:[%s239 + $0x138] sm:$0xff]
        %v426 = vld [vmem:[%s239 + $0x140] sm:$0xf]
        %v427 = vld [vmem:[%s239 + $0x144] sm:$0xff]
        %v428 = vld [vmem:[%s239 + $0x14c] sm:$0xf]
        %v429 = vld [vmem:[%s239 + $0x150] sm:$0xff]
        %v430 = vld [vmem:[%s239 + $0x158] sm:$0xf]
        %v431 = vld [vmem:[%s239 + $0x15c] sm:$0xff]
        %v432 = vld [vmem:[%s239 + $0x164] sm:$0xf]
        %v433 = vld [vmem:[%s239 + $0x168] sm:$0xff]
        %v434 = vld [vmem:[%s239 + $0x170] sm:$0xf]
        %v435 = vld [vmem:[%s239 + $0x174] sm:$0xff]
        %v436 = vld [vmem:[%s239 + $0x17c] sm:$0xf]
        %v439 = vunpack.c.l.b16 %v371
        %v440 = vunpack.c.h.b16 %v371
        %v441 = vunpack.c.l.b16 %v372
        %v442 = vunpack.c.h.b16 %v372
        %v443 = vpack.c.b16 %v441, %v439
        %v444 = vpack.c.b16 %v442, %v440
        %v511 = vunpack.c.l.b16 %v373
        %v512 = vunpack.c.h.b16 %v373
        %v513 = vunpack.c.l.b16 %v374
        %v514 = vunpack.c.l.b16 %v375
        %v515 = vunpack.c.h.b16 %v375
        %v516 = vunpack.c.l.b16 %v376
        %v517 = vunpack.c.l.b16 %v377
        %v518 = vunpack.c.h.b16 %v377
        %v519 = vunpack.c.l.b16 %v378
        %v520 = vunpack.c.l.b16 %v379
        %v521 = vunpack.c.h.b16 %v379
        %v522 = vunpack.c.l.b16 %v380
        %v523 = vunpack.c.l.b16 %v381
        %v524 = vunpack.c.h.b16 %v381
        %v525 = vunpack.c.l.b16 %v382
        %v526 = vunpack.c.l.b16 %v383
        %v527 = vunpack.c.h.b16 %v383
        %v528 = vunpack.c.l.b16 %v384
        %v529 = vunpack.c.l.b16 %v385
        %v530 = vunpack.c.h.b16 %v385
        %v531 = vunpack.c.l.b16 %v386
        %v532 = vunpack.c.l.b16 %v387
        %v533 = vunpack.c.h.b16 %v387
        %v534 = vunpack.c.l.b16 %v388
        %v535 = vunpack.c.l.b16 %v389
        %v536 = vunpack.c.h.b16 %v389
        %v537 = vunpack.c.l.b16 %v390
        %v538 = vunpack.c.l.b16 %v391
        %v539 = vunpack.c.h.b16 %v391
        %v540 = vunpack.c.l.b16 %v392
        %v541 = vunpack.c.l.b16 %v393
        %v542 = vunpack.c.h.b16 %v393
        %v543 = vunpack.c.l.b16 %v394
        %v544 = vunpack.c.l.b16 %v395
        %v545 = vunpack.c.h.b16 %v395
        %v546 = vunpack.c.l.b16 %v396
        %v547 = vunpack.c.l.b16 %v397
        %v548 = vunpack.c.h.b16 %v397
        %v549 = vunpack.c.l.b16 %v398
        %v550 = vunpack.c.l.b16 %v399
        %v551 = vunpack.c.h.b16 %v399
        %v552 = vunpack.c.l.b16 %v400
        %v553 = vunpack.c.l.b16 %v401
        %v554 = vunpack.c.h.b16 %v401
        %v555 = vunpack.c.l.b16 %v402
        %v556 = vunpack.c.l.b16 %v403
        %v557 = vunpack.c.h.b16 %v403
        %v558 = vunpack.c.l.b16 %v404
        %v559 = vunpack.c.l.b16 %v405
        %v560 = vunpack.c.h.b16 %v405
        %v561 = vunpack.c.l.b16 %v406
        %v562 = vunpack.c.l.b16 %v407
        %v563 = vunpack.c.h.b16 %v407
        %v564 = vunpack.c.l.b16 %v408
        %v565 = vunpack.c.l.b16 %v409
        %v566 = vunpack.c.h.b16 %v409
        %v567 = vunpack.c.l.b16 %v410
        %v568 = vunpack.c.l.b16 %v411
        %v569 = vunpack.c.h.b16 %v411
        %v570 = vunpack.c.l.b16 %v412
        %v571 = vunpack.c.l.b16 %v413
        %v572 = vunpack.c.h.b16 %v413
        %v573 = vunpack.c.l.b16 %v414
        %v574 = vunpack.c.l.b16 %v415
        %v575 = vunpack.c.h.b16 %v415
        %v576 = vunpack.c.l.b16 %v416
        %v577 = vunpack.c.l.b16 %v417
        %v578 = vunpack.c.h.b16 %v417
        %v579 = vunpack.c.l.b16 %v418
        %v580 = vunpack.c.l.b16 %v419
        %v581 = vunpack.c.h.b16 %v419
        %v582 = vunpack.c.l.b16 %v420
        %v583 = vunpack.c.l.b16 %v421
        %v584 = vunpack.c.h.b16 %v421
        %v585 = vunpack.c.l.b16 %v422
        %v586 = vunpack.c.l.b16 %v423
        %v587 = vunpack.c.h.b16 %v423
        %v588 = vunpack.c.l.b16 %v424
        %v589 = vunpack.c.l.b16 %v425
        %v590 = vunpack.c.h.b16 %v425
        %v591 = vunpack.c.l.b16 %v426
        %v592 = vunpack.c.l.b16 %v427
        %v593 = vunpack.c.h.b16 %v427
        %v594 = vunpack.c.l.b16 %v428
        %v595 = vunpack.c.l.b16 %v429
        %v596 = vunpack.c.h.b16 %v429
        %v597 = vunpack.c.l.b16 %v430
        %v598 = vunpack.c.l.b16 %v431
        %v599 = vunpack.c.h.b16 %v431
        %v600 = vunpack.c.l.b16 %v432
        %v601 = vunpack.c.l.b16 %v433
        %v602 = vunpack.c.h.b16 %v433
        %v603 = vunpack.c.l.b16 %v434
        %v604 = vunpack.c.l.b16 %v435
        %v605 = vunpack.c.h.b16 %v435
        %v606 = vunpack.c.l.b16 %v436
        %v607 = vpack.c.b16 %v514, %v511
        %v608 = vpack.c.b16 %v515, %v512
        %v609 = vpack.c.b16 %v516, %v513
        %v610 = vpack.c.b16 %v520, %v517
        %v611 = vpack.c.b16 %v521, %v518
        %v612 = vpack.c.b16 %v522, %v519
        %v613 = vpack.c.b16 %v526, %v523
        %v614 = vpack.c.b16 %v527, %v524
        %v615 = vpack.c.b16 %v528, %v525
        %v616 = vpack.c.b16 %v532, %v529
        %v617 = vpack.c.b16 %v533, %v530
        %v618 = vpack.c.b16 %v534, %v531
        %v619 = vpack.c.b16 %v538, %v535
        %v620 = vpack.c.b16 %v539, %v536
        %v621 = vpack.c.b16 %v540, %v537
        %v622 = vpack.c.b16 %v544, %v541
        %v623 = vpack.c.b16 %v545, %v542
        %v624 = vpack.c.b16 %v546, %v543
        %v625 = vpack.c.b16 %v550, %v547
        %v626 = vpack.c.b16 %v551, %v548
        %v627 = vpack.c.b16 %v552, %v549
        %v628 = vpack.c.b16 %v556, %v553
        %v629 = vpack.c.b16 %v557, %v554
        %v630 = vpack.c.b16 %v558, %v555
        %v631 = vpack.c.b16 %v562, %v559
        %v632 = vpack.c.b16 %v563, %v560
        %v633 = vpack.c.b16 %v564, %v561
        %v634 = vpack.c.b16 %v568, %v565
        %v635 = vpack.c.b16 %v569, %v566
        %v636 = vpack.c.b16 %v570, %v567
        %v637 = vpack.c.b16 %v574, %v571
        %v638 = vpack.c.b16 %v575, %v572
        %v639 = vpack.c.b16 %v576, %v573
        %v640 = vpack.c.b16 %v580, %v577
        %v641 = vpack.c.b16 %v581, %v578
        %v642 = vpack.c.b16 %v582, %v579
        %v643 = vpack.c.b16 %v586, %v583
        %v644 = vpack.c.b16 %v587, %v584
        %v645 = vpack.c.b16 %v588, %v585
        %v646 = vpack.c.b16 %v592, %v589
        %v647 = vpack.c.b16 %v593, %v590
        %v648 = vpack.c.b16 %v594, %v591
        %v649 = vpack.c.b16 %v598, %v595
        %v650 = vpack.c.b16 %v599, %v596
        %v651 = vpack.c.b16 %v600, %v597
        %v652 = vpack.c.b16 %v604, %v601
        %v653 = vpack.c.b16 %v605, %v602
        %v654 = vpack.c.b16 %v606, %v603
        %703 = vmatprep.subr.bf16.mxu0 %v629
        %704 = vmatpush1.bf16.msra.mxu0 %v628
        %705 = vmatprep.subr.bf16.mxu0 %v626
        %706 = vmatpush1.bf16.msra.mxu0 %v625
        %707 = vmatprep.subr.bf16.mxu0 %v623
        %708 = vmatpush1.bf16.msra.mxu0 %v622
        %709 = vmatprep.subr.bf16.mxu0 %v620
        %710 = vmatpush1.bf16.msra.mxu0 %v619
        %711 = vmatprep.subr.bf16.mxu0 %v617
        %712 = vmatpush1.bf16.msra.mxu0 %v616
        %713 = vmatprep.subr.bf16.mxu0 %v614
        %714 = vmatpush1.bf16.msra.mxu0 %v613
        %715 = vmatprep.subr.bf16.mxu0 %v611
        %716 = vmatpush1.bf16.msra.mxu0 %v610
        %717 = vmatprep.subr.bf16.mxu0 %v608
        %718 = vmatpush1.bf16.msra.mxu0 %v607
        %719 = vmatprep.subr.bf16.mxu0 %v653
        %720 = vmatpush2.bf16.msra.mxu0 %v652
        %721 = vmatprep.subr.bf16.mxu0 %v650
        %722 = vmatpush2.bf16.msra.mxu0 %v649
        %723 = vmatprep.subr.bf16.mxu0 %v647
        %724 = vmatpush2.bf16.msra.mxu0 %v646
        %725 = vmatprep.subr.bf16.mxu0 %v644
        %726 = vmatpush2.bf16.msra.mxu0 %v643
        %727 = vmatprep.subr.bf16.mxu0 %v641
        %728 = vmatpush2.bf16.msra.mxu0 %v640
        %729 = vmatprep.subr.bf16.mxu0 %v638
        %730 = vmatpush2.bf16.msra.mxu0 %v637
        %731 = vmatprep.subr.bf16.mxu0 %v635
        %732 = vmatpush2.bf16.msra.mxu0 %v634
        %733 = vmatprep.subr.bf16.mxu0 %v632
        %734 = vmatpush2.bf16.msra.mxu0 %v631
        %735 = vmatprep.mubr.bf16.mxu0 %v444
        %736 = vmatmul.mubr.bf16.gmra.mxu0 %v443
        %v737 = vpop.f32.mrf.mxu0
        %v738 = vadd.f32 0.0, %v737
        %v739 = vpop.f32.mrf.mxu0
        %v740 = vadd.f32 0.0, %v739
        %v741 = vpop.f32.mrf.mxu0
        %v742 = vadd.f32 0.0, %v741
        %v743 = vpop.f32.mrf.mxu0
        %v744 = vadd.f32 0.0, %v743
        %745 = vdwg.mxu0
        %746 = vmatprep.subr.bf16.mxu0 0
        %747 = vmatpush1.bf16.msra.mxu0 %v630
        %748 = vmatprep.subr.bf16.mxu0 0
        %749 = vmatpush1.bf16.msra.mxu0 %v627
        %750 = vmatprep.subr.bf16.mxu0 0
        %751 = vmatpush1.bf16.msra.mxu0 %v624
        %752 = vmatprep.subr.bf16.mxu0 0
        %753 = vmatpush1.bf16.msra.mxu0 %v621
        %754 = vmatprep.subr.bf16.mxu0 0
        %755 = vmatpush1.bf16.msra.mxu0 %v618
        %756 = vmatprep.subr.bf16.mxu0 0
        %757 = vmatpush1.bf16.msra.mxu0 %v615
        %758 = vmatprep.subr.bf16.mxu0 0
        %759 = vmatpush1.bf16.msra.mxu0 %v612
        %760 = vmatprep.subr.bf16.mxu0 0
        %761 = vmatpush1.bf16.msra.mxu0 %v609
        %762 = vmatprep.subr.bf16.mxu0 0
        %763 = vmatpush2.bf16.msra.mxu0 %v654
        %764 = vmatprep.subr.bf16.mxu0 0
        %765 = vmatpush2.bf16.msra.mxu0 %v651
        %766 = vmatprep.subr.bf16.mxu0 0
        %767 = vmatpush2.bf16.msra.mxu0 %v648
        %768 = vmatprep.subr.bf16.mxu0 0
        %769 = vmatpush2.bf16.msra.mxu0 %v645
        %770 = vmatprep.subr.bf16.mxu0 0
        %771 = vmatpush2.bf16.msra.mxu0 %v642
        %772 = vmatprep.subr.bf16.mxu0 0
        %773 = vmatpush2.bf16.msra.mxu0 %v639
        %774 = vmatprep.subr.bf16.mxu0 0
        %775 = vmatpush2.bf16.msra.mxu0 %v636
        %776 = vmatprep.subr.bf16.mxu0 0
        %777 = vmatpush2.bf16.msra.mxu0 %v633
        %778 = vmatprep.mubr.bf16.mxu0 %v444
        %779 = vmatmul.mubr.bf16.gmra.mxu0 %v443
        %v780 = vpop.f32.mrf.mxu0
        %v781 = vadd.f32 0.0, %v780
        %v782 = vpop.f32.mrf.mxu0
        %v783 = vpop.f32.mrf.mxu0
        %v784 = vadd.f32 0.0, %v783
        %v785 = vpop.f32.mrf.mxu0
        %786 = vdwg.mxu0
        %787 = vst [vmem:[%s263] sm:$0xff] %v738
        %788 = vst [vmem:[%s263 + $0x8] sm:$0xff] %v740
        %789 = vst [vmem:[%s263 + $0x10] sm:$0xff] %v781
        %790 = vst [vmem:[%s263 + $0x18] sm:$0xff] %v742
        %791 = vst [vmem:[%s263 + $0x20] sm:$0xff] %v744
        %792 = vst [vmem:[%s263 + $0x28] sm:$0xff] %v784
        %s793 = sand.u32 %s136, 1
        %s794 = scalar_lea.sflag [#allocation5], %s793
        %s795 = sand.u32 %s136, 1
        %s796 = smul.addr %s795, 48
        %s797 = scalar_lea.vmem [#allocation9], %s796
        // Predicated region
        $region53: #{tpu_custom_call.1} parent=35 // pred_check
          %p798 = pneg %p146
        $region54: #{tpu_custom_call.1} parent=35 // pred_check_branch
          %800 = sbr.rel (%p798) target = $region56
        $region55: #{tpu_custom_call.1} parent=35 // pred_region
          %s801 = smul.u32 2, %s24
          %s802 = smul.u32 3, %s25
          %s804 = ssub.s32 768, 768
          %805 = vsyncadd %s794, %s804
          %s806 = smul.addr %s801, 6
          %s807 = sadd.s32 %s802, %s806
          %s808 = smul.addr %s807, 128
          %s809 = scalar_lea.hbm %s4, %s808
          %s810 = sshll.u32 %s797, 4
          %s811 = int_to_ptr.vmem [resolvable:$true] %s810
          %816 = dma.vmem_to_hbm [thread:$0]  %s811, 768, %s809, %s794, 384, 768, 24
        $region56: #{tpu_custom_call.1} parent=35 // pred_fallthru
          _
      $region36: #{tpu_custom_call.1} parent=5 // pred_fallthru
        _
      %p817 = scmp.le.s32.totalorder 2, %s15
      // Predicated region
      $region57: #{tpu_custom_call.1} parent=5 // pred_check
        %p818 = pneg %p817
      $region58: #{tpu_custom_call.1} parent=5 // pred_check_branch
        %820 = sbr.rel (%p818) target = $region60
      $region59: #{tpu_custom_call.1} parent=5 // pred_region
        %s821 = ssub.s32 %s15, 2
        // Predicated region
        $region61: #{tpu_custom_call.1} parent=59 // pred_check
          %p822 = pneg %p152
        $region62: #{tpu_custom_call.1} parent=59 // pred_check_branch
          %824 = sbr.rel (%p822) target = $region64
        $region63: #{tpu_custom_call.1} parent=59 // pred_region
          %s825 = sand.u32 %s137, 1
          %s826 = scalar_lea.sflag [#allocation5], %s825
          %s827 = sand.u32 %s137, 1
          %s828 = smul.addr %s827, 48
          %s829 = scalar_lea.vmem [#allocation9], %s828
          %830 = dma.done %s826, 768
        $region64: #{tpu_custom_call.1} parent=59 // pred_fallthru
          _
      $region60: #{tpu_custom_call.1} parent=5 // pred_fallthru
        _
    $region6: #{tpu_custom_call.1} parent=1 // loop_footer
      %s19 = sadd.s32 1, %s15
    $region7: #{tpu_custom_call.1} parent=1 // loop_footer_branch
      %14 = sbr.rel target = $region3
    $region8: #{tpu_custom_call.1} parent=1 // loop_exit
      _
    %831 = vsyncpa [#allocation4], 1
    %s832 = scalar_lea.sflag [#allocation4], 1
    %833 = vsyncpa %s832, 1
    %834 = vsyncpa [#allocation7], 1
    %835 = vsyncpa [#allocation5], 1
    %s836 = scalar_lea.sflag [#allocation5], 1
    %837 = vsyncpa %s836, 1

</llo_original>
